<compile_context>
chip_gen: v5e
topology: v5e:2x2
jax: 0.10.0
libtpu: 0.0.40
codegen_flags: <defaults>
</compile_context>

<pallas_src>
import jax
import jax.numpy as jnp
from jax.experimental import pallas as pl
from jax.experimental.pallas import tpu as pltpu


def _round_up(x, m):
    return ((x + m - 1) // m) * m


def _linear_output_kernel(x_ref, w_ref, b_ref, o_ref, acc_ref):
    # x_ref:   (tm, tk)  input tile
    # w_ref:   (tn, tk)  weight tile in PyTorch (out, in) layout -- NOT transposed
    # b_ref:   (1,  tn)  bias tile
    # o_ref:   (tm, tn)  output tile (resident across the K axis)
    # acc_ref: (tm, tn)  f32 accumulator scratch
    k = pl.program_id(2)

    @pl.when(k == 0)
    def _init():
        acc_ref[...] = jnp.zeros_like(acc_ref)

    # Contract x's axis 1 with W's axis 1 (== x @ W.T) directly on the MXU;
    # no transposed copy of W is ever materialized.
    acc_ref[...] += jax.lax.dot_general(
        x_ref[...], w_ref[...],
        dimension_numbers=(((1,), (1,)), ((), ())),
        preferred_element_type=jnp.float32,
    )

    @pl.when(k == pl.num_programs(2) - 1)
    def _finalize():
        y = acc_ref[...] + b_ref[...].astype(jnp.float32)  # bias add in f32
        o_ref[...] = y.astype(o_ref.dtype)


def linear_output(x, weight, bias, *, tm=128, tn=128, tk=128):
    """Pallas version of LinearOutput.forward: x @ weight.T + bias.

    x:      (M, K)
    weight: (N, K)  PyTorch nn.Linear weight layout (rows = output features)
    bias:   (N,)
    For best performance at realistic sizes pass x/weight in bf16; the matmul
    accumulates in f32 regardless.
    """
    M, K = x.shape
    N, K2 = weight.shape
    assert K == K2 and bias.shape == (N,)

    # Clamp tiles to the (sublane, lane)-aligned problem size.
    tm = max(8, min(tm, _round_up(M, 8)))
    tn = max(128, min(tn, _round_up(N, 128)))
    tk = max(128, min(tk, _round_up(K, 128)))
    # TODO(synk): on v7x (64 MiB VMEM/TC) re-derive tm/tn/tk so that
    # 2*(tm*tk + tn*tk + tm*tn)*itemsize stays well under the scoped limit.

    Mp, Np, Kp = _round_up(M, tm), _round_up(N, tn), _round_up(K, tk)

    # Zero-pad to tile multiples (no-op when already aligned). Zero-padding K
    # leaves the contraction exact; padded N columns are sliced off below.
    xp = jnp.pad(x, ((0, Mp - M), (0, Kp - K)))
    wp = jnp.pad(weight, ((0, Np - N), (0, Kp - K)))
    bp = jnp.pad(bias, (0, Np - N)).reshape(1, Np)

    grid = (Mp // tm, Np // tn, Kp // tk)

    itemsize = jnp.dtype(x.dtype).itemsize
    cost = pl.CostEstimate(
        flops=2 * Mp * Np * Kp,
        transcendentals=0,
        bytes_accessed=(Mp * Kp + Np * Kp + Mp * Np) * itemsize
        + Np * jnp.dtype(bias.dtype).itemsize,
    )

    out = pl.pallas_call(
        _linear_output_kernel,
        out_shape=jax.ShapeDtypeStruct((Mp, Np), x.dtype),
        grid_spec=pltpu.PrefetchScalarGridSpec(
            num_scalar_prefetch=0,
            grid=grid,
            in_specs=[
                pl.BlockSpec((tm, tk), lambda i, j, k: (i, k)),  # x tile
                pl.BlockSpec((tn, tk), lambda i, j, k: (j, k)),  # W tile (no .T)
                pl.BlockSpec((1, tn), lambda i, j, k: (0, j)),   # bias tile
            ],
            out_specs=pl.BlockSpec((tm, tn), lambda i, j, k: (i, j)),
            scratch_shapes=[pltpu.VMEM((tm, tn), jnp.float32)],
        ),
        compiler_params=pltpu.CompilerParams(
            dimension_semantics=("parallel", "parallel", "arbitrary"),
            vmem_limit_bytes=32 * 1024 * 1024,
        ),
        cost_estimate=cost,
    )(xp, wp, bp)

    return out[:M, :N]


def _xavier_uniform(key, fan_in, fan_out, gain=1.0):
    # matches nn.init.xavier_uniform_ with calculate_gain('linear') == 1.0
    limit = gain * (6.0 / (fan_in + fan_out)) ** 0.5
    return jax.random.uniform(key, (fan_out, fan_in),
                              minval=-limit, maxval=limit, dtype=jnp.float32)


if __name__ == "__main__":
    # Small but lane/sublane-friendly shapes: batch=16, n_features=256, out=256.
    B, IN, OUT = 16, 256, 256

    key = jax.random.PRNGKey(0)
    k_x, k_w, k_b = jax.random.split(key, 3)

    x = jax.random.normal(k_x, (B, IN), dtype=jnp.float32)
    weight = _xavier_uniform(k_w, fan_in=IN, fan_out=OUT)   # xavier, gain('linear')=1
    bound = 1.0 / (IN ** 0.5)                               # default nn.Linear bias init
    bias = jax.random.uniform(k_b, (OUT,), minval=-bound, maxval=bound,
                              dtype=jnp.float32)

    out = linear_output(x, weight, bias)
    out = jax.block_until_ready(out)

    # Pure-JAX reference of LinearOutput.forward semantics.
    ref = x @ weight.T + bias
    assert out.shape == ref.shape
    assert jnp.allclose(out, ref, atol=2e-5, rtol=2e-5), "mismatch vs reference"

    print("KERNEL_OK")
</pallas_src>

<mosaic_0001>
module attributes {stable_mosaic.version = 11 : i64} {
  func.func @_linear_output_kernel(%arg0: i32, %arg1: i32, %arg2: i32, %arg3: memref<16x128xf32, #tpu.memory_space<vmem>>, %arg4: memref<128x128xf32, #tpu.memory_space<vmem>>, %arg5: memref<1x128xf32, #tpu.memory_space<vmem>>, %arg6: memref<16x128xf32, #tpu.memory_space<vmem>>, %arg7: memref<16x128xf32, #tpu.memory_space<vmem>>) attributes {dimension_semantics = [#tpu.dimension_semantics<parallel>, #tpu.dimension_semantics<parallel>, #tpu.dimension_semantics<arbitrary>], iteration_bounds = array<i64: 1, 2, 2>, scalar_prefetch = 0 : i64, scratch_operands = 1 : i64, tpu.core_type = #tpu.core_type<tc>, window_params = [{transform_indices = @transform_0, window_bounds = array<i64: 16, 128>}, {transform_indices = @transform_1, window_bounds = array<i64: 128, 128>}, {transform_indices = @transform_2, window_bounds = array<i64: 1, 128>}, {transform_indices = @transform_3, window_bounds = array<i64: 16, 128>}]} {
    %c0_i32 = arith.constant 0 : i32
    %0 = arith.cmpi eq, %arg2, %c0_i32 : i32
    %1 = arith.extui %0 : i1 to i32
    %c0_i32_0 = arith.constant 0 : i32
    %2 = arith.cmpi ne, %1, %c0_i32_0 : i32
    scf.if %2 {
      %cst_9 = arith.constant 0.000000e+00 : f32
      %12 = vector.broadcast %cst_9 : f32 to vector<16x128xf32>
      %c0_10 = arith.constant 0 : index
      %c0_11 = arith.constant 0 : index
      %13 = vector.load %arg7[%c0_10, %c0_11] : memref<16x128xf32, #tpu.memory_space<vmem>>, vector<16x128xf32>
      tpu.vector_store %arg7[%c0_10, %c0_11], %12 {strides = array<i32>} : memref<16x128xf32, #tpu.memory_space<vmem>>, vector<16x128xf32>,
    } else {
    }
    %c0 = arith.constant 0 : index
    %c0_1 = arith.constant 0 : index
    %3 = vector.load %arg7[%c0, %c0_1] : memref<16x128xf32, #tpu.memory_space<vmem>>, vector<16x128xf32>
    %c0_2 = arith.constant 0 : index
    %c0_3 = arith.constant 0 : index
    %4 = vector.load %arg3[%c0_2, %c0_3] : memref<16x128xf32, #tpu.memory_space<vmem>>, vector<16x128xf32>
    %c0_4 = arith.constant 0 : index
    %c0_5 = arith.constant 0 : index
    %5 = vector.load %arg4[%c0_4, %c0_5] : memref<128x128xf32, #tpu.memory_space<vmem>>, vector<128x128xf32>
    %cst = arith.constant dense<0.000000e+00> : vector<16x128xf32>
    %6 = tpu.matmul %4, %5, %cst {dimension_numbers = #tpu.dot_dimension_numbers<[1], [1], [0], [0], [0, 0, 1, 0], [], []>} : vector<16x128xf32>, vector<128x128xf32>, vector<16x128xf32> -> vector<16x128xf32>
    %7 = arith.addf %3, %6 : vector<16x128xf32>
    %c0_6 = arith.constant 0 : index
    %c0_7 = arith.constant 0 : index
    %8 = vector.load %arg7[%c0_6, %c0_7] : memref<16x128xf32, #tpu.memory_space<vmem>>, vector<16x128xf32>
    tpu.vector_store %arg7[%c0_6, %c0_7], %7 {strides = array<i32>} : memref<16x128xf32, #tpu.memory_space<vmem>>, vector<16x128xf32>,
    %c1_i32 = arith.constant 1 : i32
    %9 = arith.cmpi eq, %arg2, %c1_i32 : i32
    %10 = arith.extui %9 : i1 to i32
    %c0_i32_8 = arith.constant 0 : i32
    %11 = arith.cmpi ne, %10, %c0_i32_8 : i32
    scf.if %11 {
      %c0_9 = arith.constant 0 : index
      %c0_10 = arith.constant 0 : index
      %12 = vector.load %arg7[%c0_9, %c0_10] : memref<16x128xf32, #tpu.memory_space<vmem>>, vector<16x128xf32>
      %c0_11 = arith.constant 0 : index
      %c0_12 = arith.constant 0 : index
      %13 = vector.load %arg5[%c0_11, %c0_12] : memref<1x128xf32, #tpu.memory_space<vmem>>, vector<1x128xf32>
      %14 = vector.broadcast %13 : vector<1x128xf32> to vector<16x128xf32>
      %15 = arith.addf %12, %14 : vector<16x128xf32>
      %c0_13 = arith.constant 0 : index
      %c0_14 = arith.constant 0 : index
      %16 = vector.load %arg6[%c0_13, %c0_14] : memref<16x128xf32, #tpu.memory_space<vmem>>, vector<16x128xf32>
      tpu.vector_store %arg6[%c0_13, %c0_14], %15 {strides = array<i32>} : memref<16x128xf32, #tpu.memory_space<vmem>>, vector<16x128xf32>,
    } else {
    }
    return
  }
  func.func @transform_0(%arg0: i32, %arg1: i32, %arg2: i32) -> (i32, i32) {
    %c0_i32 = arith.constant 0 : i32
    return %arg0, %arg2 : i32, i32
  }
  func.func @transform_1(%arg0: i32, %arg1: i32, %arg2: i32) -> (i32, i32) {
    %c0_i32 = arith.constant 0 : i32
    return %arg1, %arg2 : i32, i32
  }
  func.func @transform_2(%arg0: i32, %arg1: i32, %arg2: i32) -> (i32, i32) {
    %c0_i32 = arith.constant 0 : i32
    %c0_i32_0 = arith.constant 0 : i32
    return %c0_i32, %arg1 : i32, i32
  }
  func.func @transform_3(%arg0: i32, %arg1: i32, %arg2: i32) -> (i32, i32) {
    %c0_i32 = arith.constant 0 : i32
    return %arg0, %arg1 : i32, i32
  }
}

</mosaic_0001>

<llo_original>
// kernel: tpu_custom_call.1
$region0: #{tpu_custom_call.1}
  #allocation0 [shape = 'u32[]', space=smem, size = 0x4, offset = 0x4, fixed_abs, tag = 'smem constant byte address 0x4 - core index']
  #allocation1 [shape = 'u32[72,128]{1,0:T(1,128)}', space=vmem, size = 0x9000, scoped, tag = 'internal scratch']
  #allocation2 [shape = 'f32[16,128]{1,0:T(8,128)}', space=vmem, size = 0x2000, scoped, tag = 'scratch operand']
  %s0 = inlined_call_operand.hbm [shape: f32[16,256], index: 0, kind: input, shape index: {}]
  %s1 = inlined_call_operand.hbm [shape: f32[256,256], index: 1, kind: input, shape index: {}]
  %s2 = inlined_call_operand.hbm [shape: f32[1,256], index: 2, kind: input, shape index: {}]
  %s3 = inlined_call_operand.hbm [shape: f32[16,256], index: 3, kind: output, shape index: {}]
  %s4 = sld [smem:[#allocation0]]
  $region65: #{tpu_custom_call.1} parent=0
    _
  %s6 = ssub.s32 1, %s4
  %s7 = scalar_select 0, %s6, %s4
  $region1: #{tpu_custom_call.1} parent=0
    #allocation3 [shape = 'u8[16384]{0}', space=vmem, size = 0x4000, scoped, tag = 'input window, operand 0']
    #allocation4 [shape = 's32[2]{0}', space=sflag, size = 0x8, scoped, tag = 'scoped memory for tpu_custom_call.1']
    #allocation5 [shape = 's32[2]{0}', space=sflag, size = 0x8, scoped, tag = 'scoped memory for tpu_custom_call.1']
    #allocation6 [shape = 'u8[131072]{0}', space=vmem, size = 0x20000, scoped, tag = 'input window, operand 1']
    #allocation7 [shape = 's32[2]{0}', space=sflag, size = 0x8, scoped, tag = 'scoped memory for tpu_custom_call.1']
    #allocation8 [shape = 'u8[1024]{0}', space=vmem, size = 0x400, scoped, tag = 'input window, operand 2']
    #allocation9 [shape = 'u8[16384]{0}', space=vmem, size = 0x4000, scoped, tag = 'output window, operand 0']
    %8 = vsyncpa [#allocation4], 0
    %s9 = scalar_lea.sflag [#allocation4], 1
    %10 = vsyncpa %s9, 0
    %11 = vsyncpa [#allocation7], 0
    %s12 = scalar_lea.sflag [#allocation7], 1
    %13 = vsyncpa %s12, 0
    %14 = vsyncpa [#allocation5], 0
    %s15 = scalar_lea.sflag [#allocation5], 1
    %16 = vsyncpa %s15, 0
    loop: start=0, step=1, limit=6
    $region2: #{tpu_custom_call.1} parent=1 // loop_pre_header
      _
    $region3: #{tpu_custom_call.1} parent=1 // loop_header
      %s18 = sphi 0, %s22
      %p19 = scmp.ge.s32.totalorder %s18, 6
      %s25 = sphi 0, %s44
      %s26 = sphi 0, %s40
      %s27 = sphi 0, %s36
      %s28 = sphi 0, %s25
      %s29 = sphi 0, %s26
      %s30 = sphi 0, %s27
      %s31 = sphi 0, %s28
      %s32 = sphi 0, %s29
      %s33 = sphi 0, %s30
      %s49 = sphi 0, %s51
      %s52 = sphi 0, %s49
      %s53 = sphi 0, %s52
      %s69 = sphi 0, %s53
      %s77 = sphi 0, %s79
      %s80 = sphi 0, %s77
      %s81 = sphi 0, %s80
      %s97 = sphi 0, %s81
      %s103 = sphi 0, %s105
      %s106 = sphi 0, %s103
      %s107 = sphi 0, %s106
      %s123 = sphi 0, %s107
      %s131 = sphi 0, %s133
      %s134 = sphi 0, %s131
      %s135 = sphi 0, %s134
      %s151 = sphi 0, %s135
    $region4: #{tpu_custom_call.1} parent=1 // loop_header_branch
      %21 = sbr.rel (%p19) target = $region8
    $region5: #{tpu_custom_call.1} parent=1 // loop_body
      %s23 = ssub.s32 %s18, 1
      %s24 = ssub.s32 %s18, 2
      %s34 = sadd.s32 1, %s27
      %p35 = scmp.ge.s32.totalorder %s34, 2
      %s36 = scalar_select %p35, 0, %s34
      %s37 = sadd.s32 1, %s26
      %s38 = scalar_select %p35, %s37, %s26
      %p39 = scmp.ge.s32.totalorder %s38, 2
      %s40 = scalar_select %p39, 0, %s38
      %s41 = sadd.s32 1, %s25
      %s42 = scalar_select %p39, %s41, %s25
      %p43 = scmp.ge.s32.totalorder %s42, 1
      %s44 = scalar_select %p43, 0, %s42
      %s45 = ssub.s32 %s25, %s44
      %s46 = ssub.s32 %s27, %s36
      %s47 = sor.u32 %s45, %s46
      %p48 = scmp.eq.s32.totalorder %s47, 0
      %s50 = sadd.s32 %s49, 1
      %s51 = scalar_select %p48, %s49, %s50
      %p54 = pneg %p48
      %p55 = scmp.eq.s32.totalorder %s18, 3
      %p56 = por %p54, %p55
      %p57 = scmp.ne.s32.totalorder %s49, %s52
      %p58 = scmp.eq.s32.totalorder %s18, 0
      %p59 = por %p57, %p58
      %p60 = scmp.ne.s32.totalorder %s49, %s52
      %p61 = scmp.eq.s32.totalorder %s23, 3
      %p62 = por %p60, %p61
      %p63 = scmp.ne.s32.totalorder %s52, %s53
      %p64 = scmp.eq.s32.totalorder %s23, 0
      %p65 = por %p63, %p64
      %p66 = scmp.ne.s32.totalorder %s52, %s53
      %p67 = scmp.eq.s32.totalorder %s24, 3
      %p68 = por %p66, %p67
      %p70 = scmp.ne.s32.totalorder %s53, %s69
      %p71 = scmp.eq.s32.totalorder %s24, 0
      %p72 = por %p70, %p71
      %s73 = ssub.s32 %s26, %s40
      %s74 = ssub.s32 %s27, %s36
      %s75 = sor.u32 %s73, %s74
      %p76 = scmp.eq.s32.totalorder %s75, 0
      %s78 = sadd.s32 %s77, 1
      %s79 = scalar_select %p76, %s77, %s78
      %p82 = pneg %p76
      %p83 = scmp.eq.s32.totalorder %s18, 3
      %p84 = por %p82, %p83
      %p85 = scmp.ne.s32.totalorder %s77, %s80
      %p86 = scmp.eq.s32.totalorder %s18, 0
      %p87 = por %p85, %p86
      %p88 = scmp.ne.s32.totalorder %s77, %s80
      %p89 = scmp.eq.s32.totalorder %s23, 3
      %p90 = por %p88, %p89
      %p91 = scmp.ne.s32.totalorder %s80, %s81
      %p92 = scmp.eq.s32.totalorder %s23, 0
      %p93 = por %p91, %p92
      %p94 = scmp.ne.s32.totalorder %s80, %s81
      %p95 = scmp.eq.s32.totalorder %s24, 3
      %p96 = por %p94, %p95
      %p98 = scmp.ne.s32.totalorder %s81, %s97
      %p99 = scmp.eq.s32.totalorder %s24, 0
      %p100 = por %p98, %p99
      %s101 = ssub.s32 %s26, %s40
      %p102 = scmp.eq.s32.totalorder %s101, 0
      %s104 = sadd.s32 %s103, 1
      %s105 = scalar_select %p102, %s103, %s104
      %p108 = pneg %p102
      %p109 = scmp.eq.s32.totalorder %s18, 3
      %p110 = por %p108, %p109
      %p111 = scmp.ne.s32.totalorder %s103, %s106
      %p112 = scmp.eq.s32.totalorder %s18, 0
      %p113 = por %p111, %p112
      %p114 = scmp.ne.s32.totalorder %s103, %s106
      %p115 = scmp.eq.s32.totalorder %s23, 3
      %p116 = por %p114, %p115
      %p117 = scmp.ne.s32.totalorder %s106, %s107
      %p118 = scmp.eq.s32.totalorder %s23, 0
      %p119 = por %p117, %p118
      %p120 = scmp.ne.s32.totalorder %s106, %s107
      %p121 = scmp.eq.s32.totalorder %s24, 3
      %p122 = por %p120, %p121
      %p124 = scmp.ne.s32.totalorder %s107, %s123
      %p125 = scmp.eq.s32.totalorder %s24, 0
      %p126 = por %p124, %p125
      %s127 = ssub.s32 %s25, %s44
      %s128 = ssub.s32 %s26, %s40
      %s129 = sor.u32 %s127, %s128
      %p130 = scmp.eq.s32.totalorder %s129, 0
      %s132 = sadd.s32 %s131, 1
      %s133 = scalar_select %p130, %s131, %s132
      %p136 = pneg %p130
      %p137 = scmp.eq.s32.totalorder %s18, 3
      %p138 = por %p136, %p137
      %p139 = scmp.ne.s32.totalorder %s131, %s134
      %p140 = scmp.eq.s32.totalorder %s18, 0
      %p141 = por %p139, %p140
      %p142 = scmp.ne.s32.totalorder %s131, %s134
      %p143 = scmp.eq.s32.totalorder %s23, 3
      %p144 = por %p142, %p143
      %p145 = scmp.ne.s32.totalorder %s134, %s135
      %p146 = scmp.eq.s32.totalorder %s23, 0
      %p147 = por %p145, %p146
      %p148 = scmp.ne.s32.totalorder %s134, %s135
      %p149 = scmp.eq.s32.totalorder %s24, 3
      %p150 = por %p148, %p149
      %p152 = scmp.ne.s32.totalorder %s135, %s151
      %p153 = scmp.eq.s32.totalorder %s24, 0
      %p154 = por %p152, %p153
      %p155 = scmp.le.s32.totalorder 1, %s18
      %p156 = scmp.lt.s32.totalorder %s18, 5
      %p157 = pnand %p155, %p156
      %p158 = pneg %p157
      // Predicated region
      $region9: #{tpu_custom_call.1} parent=5 // pred_check
        _
      $region10: #{tpu_custom_call.1} parent=5 // pred_check_branch
        %160 = sbr.rel (%p157) target = $region12
      $region11: #{tpu_custom_call.1} parent=5 // pred_region
        %s161 = ssub.s32 %s18, 1
      $region12: #{tpu_custom_call.1} parent=5 // pred_fallthru
        _
      %p162 = scmp.lt.s32.totalorder %s18, 4
      // Predicated region
      $region13: #{tpu_custom_call.1} parent=5 // pred_check
        %p163 = pneg %p162
      $region14: #{tpu_custom_call.1} parent=5 // pred_check_branch
        %165 = sbr.rel (%p163) target = $region16
      $region15: #{tpu_custom_call.1} parent=5 // pred_region
        // Predicated region
        $region17: #{tpu_custom_call.1} parent=15 // pred_check
          %p166 = pneg %p59
        $region18: #{tpu_custom_call.1} parent=15 // pred_check_branch
          %168 = sbr.rel (%p166) target = $region20
        $region19: #{tpu_custom_call.1} parent=15 // pred_region
          %s169 = sand.u32 %s49, 1
          %s170 = scalar_lea.sflag [#allocation4], %s169
          %s171 = sand.u32 %s49, 1
          %s172 = smul.addr %s171, 16
          %s173 = scalar_lea.vmem [#allocation3], %s172
          %s174 = smul.u32 2, %s25
          %176 = vsyncadd %s170, 0
          %s177 = smul.addr %s174, 2
          %s178 = sadd.s32 %s27, %s177
          %s179 = smul.addr %s178, 8
          %s180 = scalar_lea.hbm %s0, %s179
          %s181 = sshll.u32 %s180, 4
          %s182 = int_to_ptr.hbm [resolvable:$true] %s181
          %s183 = sshll.u32 %s173, 4
          %s184 = int_to_ptr.vmem [resolvable:$true] %s183
          %189 = dma.hbm_to_vmem [thread:$0]  %s182, 256, %s184, %s170, 256, 128, 8
        $region20: #{tpu_custom_call.1} parent=15 // pred_fallthru
          _
        // Predicated region
        $region21: #{tpu_custom_call.1} parent=15 // pred_check
          %p190 = pneg %p87
        $region22: #{tpu_custom_call.1} parent=15 // pred_check_branch
          %192 = sbr.rel (%p190) target = $region24
        $region23: #{tpu_custom_call.1} parent=15 // pred_region
          %s193 = sand.u32 %s18, 1
          %s194 = scalar_lea.sflag [#allocation7], %s193
          %s195 = sand.u32 %s77, 1
          %s196 = smul.addr %s195, 128
          %s197 = scalar_lea.vmem [#allocation6], %s196
          %s198 = smul.u32 16, %s26
          %200 = vsyncadd %s194, 0
          %s201 = smul.addr %s198, 2
          %s202 = sadd.s32 %s27, %s201
          %s203 = smul.addr %s202, 8
          %s204 = scalar_lea.hbm %s1, %s203
          %s205 = sshll.u32 %s204, 4
          %s206 = int_to_ptr.hbm [resolvable:$true] %s205
          %s207 = sshll.u32 %s197, 4
          %s208 = int_to_ptr.vmem [resolvable:$true] %s207
          %213 = dma.hbm_to_vmem [thread:$0]  %s206, 2048, %s208, %s194, 256, 128, 8
        $region24: #{tpu_custom_call.1} parent=15 // pred_fallthru
          _
        // Predicated region
        $region25: #{tpu_custom_call.1} parent=15 // pred_check
          %p214 = pneg %p113
        $region26: #{tpu_custom_call.1} parent=15 // pred_check_branch
          %216 = sbr.rel (%p214) target = $region28
        $region27: #{tpu_custom_call.1} parent=15 // pred_region
          %s217 = sand.u32 %s18, 1
          %s218 = scalar_lea.sflag [#allocation7], %s217
          %s219 = sand.u32 %s103, 1
          %s220 = scalar_lea.vmem [#allocation8], %s219
          %222 = vsyncadd %s218, 0
          %s223 = scalar_lea.hbm %s2, %s26
          %s225 = sshll.u32 %s223, 4
          %s226 = int_to_ptr.hbm [resolvable:$true] %s225
          %s227 = sshll.u32 %s220, 4
          %s228 = int_to_ptr.vmem [resolvable:$true] %s227
          %230 = dma.hbm_to_vmem [thread:$0]  %s226, 16, %s228, %s218
        $region28: #{tpu_custom_call.1} parent=15 // pred_fallthru
          _
      $region16: #{tpu_custom_call.1} parent=5 // pred_fallthru
        _
      %p231 = scmp.le.s32.totalorder 1, %s18
      %p232 = scmp.lt.s32.totalorder %s18, 5
      %p233 = pnand %p231, %p232
      %p234 = pneg %p233
      // Predicated region
      $region29: #{tpu_custom_call.1} parent=5 // pred_check
        _
      $region30: #{tpu_custom_call.1} parent=5 // pred_check_branch
        %236 = sbr.rel (%p233) target = $region32
      $region31: #{tpu_custom_call.1} parent=5 // pred_region
        %s237 = ssub.s32 %s18, 1
        %s238 = sand.u32 %s52, 1
        %s239 = scalar_lea.sflag [#allocation4], %s238
        %s240 = sand.u32 %s52, 1
        %s241 = smul.addr %s240, 16
        %s242 = scalar_lea.vmem [#allocation3], %s241
        // Predicated region
        $region33: #{tpu_custom_call.1} parent=31 // pred_check
          %p243 = pneg %p65
        $region34: #{tpu_custom_call.1} parent=31 // pred_check_branch
          %245 = sbr.rel (%p243) target = $region36
        $region35: #{tpu_custom_call.1} parent=31 // pred_region
          %247 = dma.done %s239, 256
        $region36: #{tpu_custom_call.1} parent=31 // pred_fallthru
          _
        %s248 = sand.u32 %s23, 1
        %s249 = scalar_lea.sflag [#allocation7], %s248
        %s250 = sand.u32 %s80, 1
        %s251 = smul.addr %s250, 128
        %s252 = scalar_lea.vmem [#allocation6], %s251
        // Predicated region
        $region37: #{tpu_custom_call.1} parent=31 // pred_check
          %p253 = pneg %p93
        $region38: #{tpu_custom_call.1} parent=31 // pred_check_branch
          %255 = sbr.rel (%p253) target = $region40
        $region39: #{tpu_custom_call.1} parent=31 // pred_region
          %257 = dma.done %s249, 2048
        $region40: #{tpu_custom_call.1} parent=31 // pred_fallthru
          _
        %s258 = sand.u32 %s23, 1
        %s259 = scalar_lea.sflag [#allocation7], %s258
        %s260 = sand.u32 %s106, 1
        %s261 = scalar_lea.vmem [#allocation8], %s260
        // Predicated region
        $region41: #{tpu_custom_call.1} parent=31 // pred_check
          %p262 = pneg %p119
        $region42: #{tpu_custom_call.1} parent=31 // pred_check_branch
          %264 = sbr.rel (%p262) target = $region44
        $region43: #{tpu_custom_call.1} parent=31 // pred_region
          %266 = dma.done %s259, 16
        $region44: #{tpu_custom_call.1} parent=31 // pred_fallthru
          _
        %s267 = sand.u32 %s52, 1
        %s268 = scalar_lea.sflag [#allocation4], %s267
        %s269 = sand.u32 %s52, 1
        %s270 = smul.addr %s269, 16
        %s271 = scalar_lea.vmem [#allocation3], %s270
        %p272 = pneg %p65
        %p273 = pneg %p62
        %s274 = sand.u32 %s23, 1
        %s275 = scalar_lea.sflag [#allocation7], %s274
        %s276 = sand.u32 %s80, 1
        %s277 = smul.addr %s276, 128
        %s278 = scalar_lea.vmem [#allocation6], %s277
        %p279 = pneg %p93
        %p280 = pneg %p90
        %s281 = sand.u32 %s23, 1
        %s282 = scalar_lea.sflag [#allocation7], %s281
        %s283 = sand.u32 %s106, 1
        %s284 = scalar_lea.vmem [#allocation8], %s283
        %p285 = pneg %p119
        %p286 = pneg %p116
        %p287 = pneg %p147
        %p288 = pneg %p144
        %s289 = sand.u32 %s134, 1
        %s290 = scalar_lea.sflag [#allocation5], %s289
        %s291 = sand.u32 %s134, 1
        %s292 = smul.addr %s291, 16
        %s293 = scalar_lea.vmem [#allocation9], %s292
        %s294 = smul.u32 2, %s28
        %s295 = smul.u32 16, %s29
        %s296 = smul.u32 2, %s28
        %p297 = scmp.eq.s32.totalorder %s30, 0
        // Predicated region
        $region45: #{tpu_custom_call.1} parent=31 // pred_check
          %p298 = pneg %p297
        $region46: #{tpu_custom_call.1} parent=31 // pred_check_branch
          %300 = sbr.rel (%p298) target = $region48
        $region47: #{tpu_custom_call.1} parent=31 // pred_region
          %301 = vst [vmem:[#allocation2] sm:$0xff] 0.0
          %302 = vst [vmem:[#allocation2 + $0x8] sm:$0xff] 0.0
        $region48: #{tpu_custom_call.1} parent=31 // pred_fallthru
          _
        %v303 = vld [vmem:[#allocation2] sm:$0xff]
        %v304 = vld [vmem:[#allocation2 + $0x8] sm:$0xff]
        %v305 = vld [vmem:[%s242] sm:$0xff]
        %v306 = vld [vmem:[%s242 + $0x8] sm:$0xff]
        %v307 = vld [vmem:[%s252] sm:$0xff]
        %v308 = vld [vmem:[%s252 + $0x8] sm:$0xff]
        %v309 = vld [vmem:[%s252 + $0x10] sm:$0xff]
        %v310 = vld [vmem:[%s252 + $0x18] sm:$0xff]
        %v311 = vld [vmem:[%s252 + $0x20] sm:$0xff]
        %v312 = vld [vmem:[%s252 + $0x28] sm:$0xff]
        %v313 = vld [vmem:[%s252 + $0x30] sm:$0xff]
        %v314 = vld [vmem:[%s252 + $0x38] sm:$0xff]
        %v315 = vld [vmem:[%s252 + $0x40] sm:$0xff]
        %v316 = vld [vmem:[%s252 + $0x48] sm:$0xff]
        %v317 = vld [vmem:[%s252 + $0x50] sm:$0xff]
        %v318 = vld [vmem:[%s252 + $0x58] sm:$0xff]
        %v319 = vld [vmem:[%s252 + $0x60] sm:$0xff]
        %v320 = vld [vmem:[%s252 + $0x68] sm:$0xff]
        %v321 = vld [vmem:[%s252 + $0x70] sm:$0xff]
        %v322 = vld [vmem:[%s252 + $0x78] sm:$0xff]
        %323 = vmatpush.xpose.msra.mxu0 %v322
        %324 = vmatpush.xpose.msra.mxu0 %v321
        %325 = vmatpush.xpose.msra.mxu0 %v320
        %326 = vmatpush.xpose.msra.mxu0 %v319
        %327 = vmatpush.xpose.msra.mxu0 %v318
        %328 = vmatpush.xpose.msra.mxu0 %v317
        %329 = vmatpush.xpose.msra.mxu0 %v316
        %330 = vmatpush.xpose.msra.mxu0 %v315
        %331 = vmatpush.xpose.msra.mxu0 %v314
        %332 = vmatpush.xpose.msra.mxu0 %v313
        %333 = vmatpush.xpose.msra.mxu0 %v312
        %334 = vmatpush.xpose.msra.mxu0 %v311
        %335 = vmatpush.xpose.msra.mxu0 %v310
        %336 = vmatpush.xpose.msra.mxu0 %v309
        %337 = vmatpush.xpose.msra.mxu0 %v308
        %338 = vmatpush.xpose.msra.mxu0 %v307
        %339 = vmatmul.f32.gmra.mxu0 %v305
        %v340 = vpop.f32.mrf.mxu0
        %v341 = vadd.f32 0.0, %v340
        %342 = vmatmul.f32.gmra.mxu0 %v306
        %v343 = vpop.f32.mrf.mxu0
        %v344 = vadd.f32 0.0, %v343
        %345 = vdwg.mxu0
        %v346 = vadd.f32 %v303, %v341
        %v347 = vadd.f32 %v304, %v344
        %348 = vst [vmem:[#allocation2] sm:$0xff] %v346
        %349 = vst [vmem:[#allocation2 + $0x8] sm:$0xff] %v347
        %p350 = scmp.eq.s32.totalorder %s30, 1
        // Predicated region
        $region49: #{tpu_custom_call.1} parent=31 // pred_check
          %p351 = pneg %p350
        $region50: #{tpu_custom_call.1} parent=31 // pred_check_branch
          %353 = sbr.rel (%p351) target = $region52
        $region51: #{tpu_custom_call.1} parent=31 // pred_region
          %v354 = vld [vmem:[#allocation2] sm:$0xff]
          %v355 = vld [vmem:[#allocation2 + $0x8] sm:$0xff]
          %v356 = vld [vmem:[%s261] sm:$0x1]
          %v358 = vperm.slane %v356, 0
          %v360 = vadd.f32 %v354, %v358
          %v361 = vadd.f32 %v355, %v358
          %362 = vst [vmem:[%s293] sm:$0xff] %v360
          %363 = vst [vmem:[%s293 + $0x8] sm:$0xff] %v361
        $region52: #{tpu_custom_call.1} parent=31 // pred_fallthru
          _
        %s364 = sand.u32 %s134, 1
        %s365 = scalar_lea.sflag [#allocation5], %s364
        %s366 = sand.u32 %s134, 1
        %s367 = smul.addr %s366, 16
        %s368 = scalar_lea.vmem [#allocation9], %s367
        // Predicated region
        $region53: #{tpu_custom_call.1} parent=31 // pred_check
          %p369 = pneg %p144
        $region54: #{tpu_custom_call.1} parent=31 // pred_check_branch
          %371 = sbr.rel (%p369) target = $region56
        $region55: #{tpu_custom_call.1} parent=31 // pred_region
          %s372 = smul.u32 2, %s28
          %374 = vsyncadd %s365, 0
          %s375 = smul.addr %s372, 2
          %s376 = sadd.s32 %s29, %s375
          %s377 = smul.addr %s376, 8
          %s378 = scalar_lea.hbm %s3, %s377
          %s379 = sshll.u32 %s368, 4
          %s380 = int_to_ptr.vmem [resolvable:$true] %s379
          %s381 = sshll.u32 %s378, 4
          %s382 = int_to_ptr.hbm [resolvable:$true] %s381
          %387 = dma.vmem_to_hbm [thread:$0]  %s380, 256, %s382, %s365, 128, 256, 8
        $region56: #{tpu_custom_call.1} parent=31 // pred_fallthru
          _
      $region32: #{tpu_custom_call.1} parent=5 // pred_fallthru
        _
      %p388 = scmp.le.s32.totalorder 2, %s18
      // Predicated region
      $region57: #{tpu_custom_call.1} parent=5 // pred_check
        %p389 = pneg %p388
      $region58: #{tpu_custom_call.1} parent=5 // pred_check_branch
        %391 = sbr.rel (%p389) target = $region60
      $region59: #{tpu_custom_call.1} parent=5 // pred_region
        %s392 = ssub.s32 %s18, 2
        // Predicated region
        $region61: #{tpu_custom_call.1} parent=59 // pred_check
          %p393 = pneg %p150
        $region62: #{tpu_custom_call.1} parent=59 // pred_check_branch
          %395 = sbr.rel (%p393) target = $region64
        $region63: #{tpu_custom_call.1} parent=59 // pred_region
          %s396 = sand.u32 %s135, 1
          %s397 = scalar_lea.sflag [#allocation5], %s396
          %s398 = sand.u32 %s135, 1
          %s399 = smul.addr %s398, 16
          %s400 = scalar_lea.vmem [#allocation9], %s399
          %402 = dma.done %s397, 256
        $region64: #{tpu_custom_call.1} parent=59 // pred_fallthru
          _
      $region60: #{tpu_custom_call.1} parent=5 // pred_fallthru
        _
    $region6: #{tpu_custom_call.1} parent=1 // loop_footer
      %s22 = sadd.s32 1, %s18
    $region7: #{tpu_custom_call.1} parent=1 // loop_footer_branch
      %17 = sbr.rel target = $region3
    $region8: #{tpu_custom_call.1} parent=1 // loop_exit
      _
    %403 = vsyncpa [#allocation4], 1
    %s404 = scalar_lea.sflag [#allocation4], 1
    %405 = vsyncpa %s404, 1
    %406 = vsyncpa [#allocation7], 1
    %s407 = scalar_lea.sflag [#allocation7], 1
    %408 = vsyncpa %s407, 1
    %409 = vsyncpa [#allocation5], 1
    %s410 = scalar_lea.sflag [#allocation5], 1
    %411 = vsyncpa %s410, 1

</llo_original>
